<compile_context>
chip_gen: v7x
topology: tpu7x:2x2x1
jax: 0.10.0
libtpu: 0.0.40
codegen_flags: <defaults>
</compile_context>

<pallas_src>
import math

import jax
import jax.numpy as jnp
from jax.experimental import pallas as pl
from jax.experimental.pallas import tpu as pltpu


# ---------------------------------------------------------------------------
# Per-generation VMEM budget (v5e/v6e: 128 MiB physical, v7x: 64 MiB).
# ---------------------------------------------------------------------------
def _vmem_limit_bytes():
    cap = 64 * 1024 * 1024  # conservative fallback = v7x physical VMEM
    try:
        c = int(getattr(pltpu.get_tpu_info(), "vmem_capacity_bytes", 0))
        if c > 0:
            cap = c
    except Exception:
        pass
    # request half the physical capacity, capped at 64 MiB.
    return min(max(cap // 2, 16 * 1024 * 1024), 64 * 1024 * 1024)


_VMEM_LIMIT = _vmem_limit_bytes()
_TILE_BUDGET = _VMEM_LIMIT // 2  # bytes the per-step blocks should fit into


# ---------------------------------------------------------------------------
# Kernel 1: tiled linear layer  y = x @ W_t + b   (W_t pre-transposed [in, out])
# ---------------------------------------------------------------------------
def _linear_kernel(x_ref, w_ref, b_ref, o_ref):
    y = jnp.dot(x_ref[...], w_ref[...], preferred_element_type=jnp.float32)
    o_ref[...] = (y + b_ref[...]).astype(o_ref.dtype)


def _choose_linear_tiles(N, in_dim, out_dim, itemsize, budget):
    """Row tile (multiple of 8 or full N, capped at 1024) and out-column tile
    (full out_dim if the resident weight fits ~half the budget, else a
    lane-dense multiple of 128). Keeps VMEM bounded for large E on v7x."""
    def w_bytes(tn):
        return 2 * in_dim * tn * itemsize  # double-buffered weight block

    if w_bytes(out_dim) <= budget // 2:
        tn = out_dim
    else:
        tn = max(128, ((budget // 2) // (2 * in_dim * itemsize)) // 128 * 128)
        tn = min(tn, out_dim)

    avail = max(budget - w_bytes(tn), 2 * itemsize * (in_dim + tn) * 8)
    tm = avail // (2 * itemsize * (in_dim + tn))
    tm = min(tm, 1024, N)
    if tm < N:
        tm = max(8, (tm // 8) * 8)
    return int(tm), int(tn)


def linear(x, w_t, b, *, vmem_limit, budget):
    """x: [N, in], w_t: [in, out], b: [1, out] -> [N, out]."""
    N, in_dim = x.shape
    out_dim = w_t.shape[1]
    itemsize = jnp.dtype(x.dtype).itemsize
    tm, tn = _choose_linear_tiles(N, in_dim, out_dim, itemsize, budget)
    grid = (pl.cdiv(N, tm), pl.cdiv(out_dim, tn))
    return pl.pallas_call(
        _linear_kernel,
        out_shape=jax.ShapeDtypeStruct((N, out_dim), x.dtype),
        grid=grid,
        in_specs=[
            pl.BlockSpec((tm, in_dim), lambda i, j: (i, 0)),   # streamed rows
            pl.BlockSpec((in_dim, tn), lambda i, j: (0, j)),   # weight columns
            pl.BlockSpec((1, tn), lambda i, j: (0, j)),        # bias columns
        ],
        out_specs=pl.BlockSpec((tm, tn), lambda i, j: (i, j)),
        compiler_params=pltpu.CompilerParams(
            dimension_semantics=("parallel", "parallel"),
            vmem_limit_bytes=vmem_limit,
        ),
    )(x, w_t, b)


# ---------------------------------------------------------------------------
# Kernel 2: attention core with online softmax over the frame axis.
#   q : [T, E]        (scale 1/sqrt(Dh) already folded into the q projection)
#   kv: [V, F, 2E]    (K in columns [:E], V in columns [E:], per-head slices)
#   out: [V, T, E]    lane-dense; head h occupies columns h*Dh:(h+1)*Dh
# grid = (video blocks, text blocks, frame blocks);  frame axis = "arbitrary".
# ---------------------------------------------------------------------------
def _choose_attention_tiles(V, T, F, E, H, itemsize, budget):
    lane = 128

    def cost(vb, tq, tf):
        q = 2 * tq * E * itemsize                  # double-buffered Q block
        kv = 2 * vb * tf * 2 * E * itemsize        # double-buffered KV block
        out = 2 * vb * tq * E * itemsize           # double-buffered out block
        acc = vb * tq * E * 4                      # f32 accumulator scratch
        ml = 2 * vb * tq * max(H, lane) * 4        # m / l scratch (lane-padded)
        logits = 2 * vb * tq * max(tf, lane) * 4   # per-head f32 logits + p
        return q + kv + out + acc + ml + logits

    # text-row tile: full T when small, else a multiple of 8 (cap 512).
    tq = T if T <= 512 else 512
    if tq < T:
        tq = max(8, (tq // 8) * 8)

    # frame tile: full F when it fits, else the largest multiple-of-8 divisor.
    tf = F
    if cost(1, tq, F) > budget:
        divs = [d for d in range(8, F, 8) if F % d == 0 and cost(1, tq, d) <= budget]
        if divs:
            tf = max(divs)
        # TODO(synk): add frame-tail masking so F that is not a multiple of 8
        #             can also be tiled (currently falls back to full F).

    while tq > 8 and cost(1, tq, tf) > budget:
        tq = max(8, ((tq // 2) // 8) * 8)

    # batch videos per step (amortizes per-step overhead); cap the unroll.
    vb = 1
    while vb < V and vb < 8 and cost(vb + 1, tq, tf) <= budget:
        vb += 1
    return int(vb), int(tq), int(tf)


def _make_attn_kernel(num_heads, head_dim, embed_dim, block_videos):
    H, Dh, E, VB = num_heads, head_dim, embed_dim, block_videos

    def kernel(q_ref, kv_ref, o_ref, m_sc, l_sc, acc_sc):
        fi = pl.program_id(2)

        @pl.when(fi == 0)
        def _init():
            m_sc[...] = jnp.full(m_sc.shape, -jnp.inf, dtype=m_sc.dtype)
            l_sc[...] = jnp.zeros(l_sc.shape, dtype=l_sc.dtype)
            acc_sc[...] = jnp.zeros(acc_sc.shape, dtype=acc_sc.dtype)

        q_full = q_ref[...]  # [tq, E]; resident across the frame axis

        for b in range(VB):            # static unroll over the video block
            kv_b = kv_ref[b]           # [tf, 2E]
            for h in range(H):         # static unroll over heads
                hs, he = h * Dh, (h + 1) * Dh
                q_h = q_full[:, hs:he]             # [tq, Dh]  (static lane slice)
                k_hb = kv_b[:, hs:he]              # [tf, Dh]
                v_hb = kv_b[:, E + hs:E + he]      # [tf, Dh]

                s = jnp.einsum("td,fd->tf", q_h, k_hb,
                               preferred_element_type=jnp.float32)   # [tq, tf]

                m_prev = m_sc[b, :, h:h + 1]                          # [tq, 1]
                m_new = jnp.maximum(m_prev, jnp.max(s, axis=-1, keepdims=True))
                alpha = jnp.exp(m_prev - m_new)
                p = jnp.exp(s - m_new)
                l_sc[b, :, h:h + 1] = (alpha * l_sc[b, :, h:h + 1]
                                       + jnp.sum(p, axis=-1, keepdims=True))
                pv = jnp.einsum("tf,fd->td", p.astype(v_hb.dtype), v_hb,
                                preferred_element_type=jnp.float32)   # [tq, Dh]
                acc_sc[b, :, hs:he] = alpha * acc_sc[b, :, hs:he] + pv
                m_sc[b, :, h:h + 1] = m_new

        @pl.when(fi == pl.num_programs(2) - 1)
        def _finalize():
            # Exact divide: the denominator is only [vb, tq, 1] per head, so the
            # EUP approx reciprocal saves nothing and costs accuracy.
            for h in range(H):
                hs, he = h * Dh, (h + 1) * Dh
                o_ref[:, :, hs:he] = (acc_sc[:, :, hs:he]
                                      / l_sc[:, :, h:h + 1]).astype(o_ref.dtype)

    return kernel


def attention_core(q, kv, num_heads, *, vmem_limit, budget):
    """q: [T, E] (pre-scaled), kv: [V, F, 2E] -> [V, T, E]."""
    T, E = q.shape
    V, F, twoE = kv.shape
    assert twoE == 2 * E
    Dh = E // num_heads
    itemsize = jnp.dtype(q.dtype).itemsize
    vb, tq, tf = _choose_attention_tiles(V, T, F, E, num_heads, itemsize, budget)
    grid = (pl.cdiv(V, vb), pl.cdiv(T, tq), pl.cdiv(F, tf))
    return pl.pallas_call(
        _make_attn_kernel(num_heads, Dh, E, vb),
        out_shape=jax.ShapeDtypeStruct((V, T, E), q.dtype),
        grid=grid,
        in_specs=[
            # Q block only depends on the text-tile index -> stays resident
            # across the whole frame loop (and across video blocks).
            pl.BlockSpec((tq, E), lambda vi, ti, fi: (ti, 0)),
            # packed K/V stream: one DMA per (video block, frame block).
            pl.BlockSpec((vb, tf, 2 * E), lambda vi, ti, fi: (vi, fi, 0)),
        ],
        # output block invariant across the frame axis -> written once at the end.
        out_specs=pl.BlockSpec((vb, tq, E), lambda vi, ti, fi: (vi, ti, 0)),
        scratch_shapes=[
            pltpu.VMEM((vb, tq, num_heads), jnp.float32),  # running max  m
            pltpu.VMEM((vb, tq, num_heads), jnp.float32),  # running sum  l
            pltpu.VMEM((vb, tq, E), jnp.float32),          # f32 accumulator
        ],
        compiler_params=pltpu.CompilerParams(
            dimension_semantics=("parallel", "parallel", "arbitrary"),
            vmem_limit_bytes=vmem_limit,
        ),
    )(q, kv)


# ---------------------------------------------------------------------------
# One-time parameter preparation (do this OUTSIDE the forward / jit).
# ---------------------------------------------------------------------------
def prepare_params(params, num_heads):
    E = params["q_w_t"].shape[0]
    scale = 1.0 / math.sqrt(E // num_heads)
    return {
        "q_w_t": params["q_w_t"] * scale,        # fold 1/sqrt(Dh) into Q proj
        "q_b": params["q_b"] * scale,
        "kv_w_t": jnp.concatenate([params["k_w_t"], params["v_w_t"]], axis=1),
        "kv_b": jnp.concatenate([params["k_b"], params["v_b"]], axis=1),
        "o_w_t": params["o_w_t"],
        "o_b": params["o_b"],
    }


# ---------------------------------------------------------------------------
# Full module forward
# ---------------------------------------------------------------------------
def multi_headed_attention(text_embeds, video_embeds, prepared, num_heads):
    T, E = text_embeds.shape
    V, F, _ = video_embeds.shape
    vmem_limit = _VMEM_LIMIT
    budget = _TILE_BUDGET

    # Q projection (scale already folded into the prepared weights).
    q = linear(text_embeds, prepared["q_w_t"], prepared["q_b"],
               vmem_limit=vmem_limit, budget=budget)                       # [T, E]

    # Fused K/V projection: one pass over the video activations. The output
    # stays packed as [V, F, 2E]; the attention kernel slices per-head K/V
    # columns internally, so there is NO K/V transpose or split in XLA.
    kv = linear(video_embeds.reshape(V * F, E), prepared["kv_w_t"],
                prepared["kv_b"], vmem_limit=vmem_limit, budget=budget)    # [V*F, 2E]
    kv = kv.reshape(V, F, 2 * E)  # contiguous reshape: free

    att = attention_core(q, kv, num_heads,
                         vmem_limit=vmem_limit, budget=budget)             # [V, T, E]

    o = linear(att.reshape(V * T, E), prepared["o_w_t"], prepared["o_b"],
               vmem_limit=vmem_limit, budget=budget)
    return o.reshape(V, T, E)


# ---------------------------------------------------------------------------
# Pure-JAX reference (mirrors the torch code) for a correctness check
# ---------------------------------------------------------------------------
def reference(text_embeds, video_embeds, params, num_heads):
    T, E = text_embeds.shape
    V, F, _ = video_embeds.shape
    Dh = E // num_heads
    q = text_embeds @ params["q_w_t"] + params["q_b"]
    k = video_embeds @ params["k_w_t"] + params["k_b"]
    v = video_embeds @ params["v_w_t"] + params["v_b"]
    q = q.reshape(T, num_heads, Dh).transpose(1, 2, 0)
    k = k.reshape(V, F, num_heads, Dh).transpose(0, 2, 1, 3)
    v = v.reshape(V, F, num_heads, Dh).transpose(0, 2, 3, 1)
    logits = jnp.einsum("vhfd,hdt->vhft", k, q) / math.sqrt(Dh)
    w = jax.nn.softmax(logits, axis=2)
    att = jnp.einsum("vhdf,vhft->vhdt", v, w)
    att = att.transpose(0, 3, 1, 2).reshape(V, T, E)
    return (att.reshape(V * T, E) @ params["o_w_t"] + params["o_b"]).reshape(V, T, E)


if __name__ == "__main__":
    embed_dim = 32
    num_heads = 4
    num_texts = 8
    num_vids = 2
    num_frames = 8

    key = jax.random.PRNGKey(0)
    keys = jax.random.split(key, 10)

    def init_linear(kw, kb, in_dim, out_dim):
        bound = 1.0 / math.sqrt(in_dim)
        w = jax.random.uniform(kw, (out_dim, in_dim), jnp.float32, -bound, bound)
        b = jax.random.uniform(kb, (out_dim,), jnp.float32, -bound, bound)
        return w.T, b.reshape(1, out_dim)  # pre-transposed weight, 2-D bias

    raw = {}
    raw["q_w_t"], raw["q_b"] = init_linear(keys[0], keys[1], embed_dim, embed_dim)
    raw["k_w_t"], raw["k_b"] = init_linear(keys[2], keys[3], embed_dim, embed_dim)
    raw["v_w_t"], raw["v_b"] = init_linear(keys[4], keys[5], embed_dim, embed_dim)
    raw["o_w_t"], raw["o_b"] = init_linear(keys[6], keys[7], embed_dim, embed_dim)

    text_embeds = jax.random.normal(keys[8], (num_texts, embed_dim), jnp.float32)
    video_embeds = jax.random.normal(keys[9], (num_vids, num_frames, embed_dim), jnp.float32)

    prepared = prepare_params(raw, num_heads)
    out = multi_headed_attention(text_embeds, video_embeds, prepared, num_heads)
    out = jax.block_until_ready(out)

    ref = reference(text_embeds, video_embeds, raw, num_heads)
    assert out.shape == (num_vids, num_texts, embed_dim)
    assert jnp.allclose(out, ref, atol=2e-3, rtol=2e-3), "mismatch vs reference"

    print("KERNEL_OK")
</pallas_src>

<mosaic_0001>
module attributes {stable_mosaic.version = 11 : i64} {
  func.func @_linear_kernel(%arg0: i32, %arg1: i32, %arg2: memref<8x32xf32, #tpu.memory_space<vmem>>, %arg3: memref<32x32xf32, #tpu.memory_space<vmem>>, %arg4: memref<1x32xf32, #tpu.memory_space<vmem>>, %arg5: memref<8x32xf32, #tpu.memory_space<vmem>>) attributes {dimension_semantics = [#tpu.dimension_semantics<parallel>, #tpu.dimension_semantics<parallel>], iteration_bounds = array<i64: 1, 1>, scalar_prefetch = 0 : i64, scratch_operands = 0 : i64, tpu.core_type = #tpu.core_type<tc>, window_params = [{transform_indices = @transform_0, window_bounds = array<i64: 8, 32>}, {transform_indices = @transform_1, window_bounds = array<i64: 32, 32>}, {transform_indices = @transform_2, window_bounds = array<i64: 1, 32>}, {transform_indices = @transform_3, window_bounds = array<i64: 8, 32>}]} {
    %c0 = arith.constant 0 : index
    %c0_0 = arith.constant 0 : index
    %0 = vector.load %arg2[%c0, %c0_0] : memref<8x32xf32, #tpu.memory_space<vmem>>, vector<8x32xf32>
    %c0_1 = arith.constant 0 : index
    %c0_2 = arith.constant 0 : index
    %1 = vector.load %arg3[%c0_1, %c0_2] : memref<32x32xf32, #tpu.memory_space<vmem>>, vector<32x32xf32>
    %cst = arith.constant dense<0.000000e+00> : vector<8x32xf32>
    %2 = tpu.matmul %0, %1, %cst {dimension_numbers = #tpu.dot_dimension_numbers<[1], [0], [0], [1], [0, 0, 1, 1], [], []>} : vector<8x32xf32>, vector<32x32xf32>, vector<8x32xf32> -> vector<8x32xf32>
    %c0_3 = arith.constant 0 : index
    %c0_4 = arith.constant 0 : index
    %3 = vector.load %arg4[%c0_3, %c0_4] : memref<1x32xf32, #tpu.memory_space<vmem>>, vector<1x32xf32>
    %4 = vector.broadcast %3 : vector<1x32xf32> to vector<8x32xf32>
    %5 = arith.addf %2, %4 : vector<8x32xf32>
    %c0_5 = arith.constant 0 : index
    %c0_6 = arith.constant 0 : index
    %6 = vector.load %arg5[%c0_5, %c0_6] : memref<8x32xf32, #tpu.memory_space<vmem>>, vector<8x32xf32>
    tpu.vector_store %arg5[%c0_5, %c0_6], %5 {strides = array<i32>} : memref<8x32xf32, #tpu.memory_space<vmem>>, vector<8x32xf32>,
    return
  }
  func.func @transform_0(%arg0: i32, %arg1: i32) -> (i32, i32) {
    %c0_i32 = arith.constant 0 : i32
    %c0_i32_0 = arith.constant 0 : i32
    return %arg0, %c0_i32 : i32, i32
  }
  func.func @transform_1(%arg0: i32, %arg1: i32) -> (i32, i32) {
    %c0_i32 = arith.constant 0 : i32
    %c0_i32_0 = arith.constant 0 : i32
    return %c0_i32, %arg1 : i32, i32
  }
  func.func @transform_2(%arg0: i32, %arg1: i32) -> (i32, i32) {
    %c0_i32 = arith.constant 0 : i32
    %c0_i32_0 = arith.constant 0 : i32
    return %c0_i32, %arg1 : i32, i32
  }
  func.func @transform_3(%arg0: i32, %arg1: i32) -> (i32, i32) {
    %c0_i32 = arith.constant 0 : i32
    return %arg0, %arg1 : i32, i32
  }
}

</mosaic_0001>

<llo_original>
// kernel: tpu_custom_call.1
$region0: #{tpu_custom_call.1}
  #allocation0 [shape = 'u32[]', space=smem, size = 0x4, offset = 0x4, fixed_abs, tag = 'smem constant byte address 0x4 - core index']
  #allocation1 [shape = 'u32[144,128]{1,0:T(1,128)}', space=vmem, size = 0x12000, scoped, tag = 'internal scratch']
  %s0 = inlined_call_operand.hbm [shape: f32[8,32], index: 0, kind: input, shape index: {}]
  %s1 = inlined_call_operand.hbm [shape: f32[32,32], index: 1, kind: input, shape index: {}]
  %s2 = inlined_call_operand.vmem [shape: f32[1,32], index: 2, kind: input, shape index: {}]
  %s3 = inlined_call_operand.hbm [shape: f32[8,32], index: 3, kind: output, shape index: {}]
  %s4 = sld [smem:[#allocation0]]
  $region30: #{tpu_custom_call.1} parent=0
    _
  %s6 = ssub.s32 1, %s4
  %s7 = scalar_select 0, %s6, %s4
  $region1: #{tpu_custom_call.1} parent=0
    #allocation2 [shape = 'u8[4096]{0}', space=vmem, size = 0x1000, scoped, tag = 'input window, operand 0, single buffered']
    #allocation3 [shape = 's32[1]{0}', space=sflag, size = 0x4, scoped, tag = 'scoped memory for tpu_custom_call.1']
    #allocation4 [shape = 's32[1]{0}', space=sflag, size = 0x4, scoped, tag = 'scoped memory for tpu_custom_call.1']
    #allocation5 [shape = 'u8[16384]{0}', space=vmem, size = 0x4000, scoped, tag = 'input window, operand 1, single buffered']
    #allocation6 [shape = 's32[1]{0}', space=sflag, size = 0x4, scoped, tag = 'scoped memory for tpu_custom_call.1']
    #allocation7 [shape = 'u8[4096]{0}', space=vmem, size = 0x1000, scoped, tag = 'output window, operand 0, single buffered']
    %8 = vsyncpa [#allocation3], 0
    %9 = vsyncpa [#allocation6], 0
    %10 = vsyncpa [#allocation4], 0
    // Predicated region
    $region2: #{tpu_custom_call.1} parent=1 // pred_check
      _
    $region3: #{tpu_custom_call.1} parent=1 // pred_check_branch
      %12 = sbr.rel (0) target = $region5
    $region4: #{tpu_custom_call.1} parent=1 // pred_region
      %s14 = ssub.s32 128, 128
      %15 = vsyncadd [#allocation3], %s14
      %s17 = sshll.u32 [#allocation2], 4
      %s18 = int_to_ptr.vmem [resolvable:$true] %s17
      %20 = dma.hbm_to_vmem [thread:$0]  %s0, 128, %s18, [#allocation3]
    $region5: #{tpu_custom_call.1} parent=1 // pred_fallthru
      _
    // Predicated region
    $region6: #{tpu_custom_call.1} parent=1 // pred_check
      _
    $region7: #{tpu_custom_call.1} parent=1 // pred_check_branch
      %22 = sbr.rel (0) target = $region9
    $region8: #{tpu_custom_call.1} parent=1 // pred_region
      %s24 = ssub.s32 512, 512
      %25 = vsyncadd [#allocation6], %s24
      %s26 = sshll.u32 [#allocation5], 4
      %s27 = int_to_ptr.vmem [resolvable:$true] %s26
      %32 = dma.hbm_to_vmem [thread:$0]  %s1, 512, %s27, [#allocation6], 128, 128, 8
    $region9: #{tpu_custom_call.1} parent=1 // pred_fallthru
      _
    // Predicated region
    $region10: #{tpu_custom_call.1} parent=1 // pred_check
      _
    $region11: #{tpu_custom_call.1} parent=1 // pred_check_branch
      %34 = sbr.rel (0) target = $region13
    $region12: #{tpu_custom_call.1} parent=1 // pred_region
      _
    $region13: #{tpu_custom_call.1} parent=1 // pred_fallthru
      _
    // Predicated region
    $region14: #{tpu_custom_call.1} parent=1 // pred_check
      _
    $region15: #{tpu_custom_call.1} parent=1 // pred_check_branch
      %36 = sbr.rel (0) target = $region17
    $region16: #{tpu_custom_call.1} parent=1 // pred_region
      %37 = dma.done [#allocation3], 128
    $region17: #{tpu_custom_call.1} parent=1 // pred_fallthru
      _
    // Predicated region
    $region18: #{tpu_custom_call.1} parent=1 // pred_check
      _
    $region19: #{tpu_custom_call.1} parent=1 // pred_check_branch
      %39 = sbr.rel (0) target = $region21
    $region20: #{tpu_custom_call.1} parent=1 // pred_region
      %40 = dma.done [#allocation6], 512
    $region21: #{tpu_custom_call.1} parent=1 // pred_fallthru
      _
    %v41 = vld [vmem:[#allocation2] sm:$0xff]
    %v42 = vld [vmem:[#allocation5] sm:$0xff]
    %v43 = vld [vmem:[#allocation5 + $0x8] sm:$0xff]
    %v44 = vld [vmem:[#allocation5 + $0x10] sm:$0xff]
    %v45 = vld [vmem:[#allocation5 + $0x18] sm:$0xff]
    %v46 = vld [vmem:[%s2] sm:$0x1]
    %v48 = vlaneseq
    %v49 = vshrl.u32 %v48, 7
    %v50 = vsub.s32 0, %v49
    %v51 = vrot.slane %v46, %v50
    %vm53 = vcmask 261120
    %v55 = vsel %vm53, %v41, 0
    %57 = vmatprep.subr.mxu0 0.0
    %58 = vmatpush1.msra.mxu0 %v42
    %59 = vmatprep.subr.mxu0 0.0
    %60 = vmatpush1.msra.mxu0 %v43
    %61 = vmatprep.subr.mxu0 0.0
    %62 = vmatpush1.msra.mxu0 %v44
    %63 = vmatprep.subr.mxu0 0.0
    %64 = vmatpush1.msra.mxu0 %v45
    %65 = vmatprep.subr.mxu0 0.0
    %66 = vmatpush1.msra.mxu0 0.0
    %67 = vmatprep.subr.mxu0 0.0
    %68 = vmatpush1.msra.mxu0 0.0
    %69 = vmatprep.subr.mxu0 0.0
    %70 = vmatpush1.msra.mxu0 0.0
    %71 = vmatprep.subr.mxu0 0.0
    %72 = vmatpush1.msra.mxu0 0.0
    %73 = vmatprep.subr.mxu0 0.0
    %74 = vmatpush1.msra.mxu0 0.0
    %75 = vmatprep.subr.mxu0 0.0
    %76 = vmatpush1.msra.mxu0 0.0
    %77 = vmatprep.subr.mxu0 0.0
    %78 = vmatpush1.msra.mxu0 0.0
    %79 = vmatprep.subr.mxu0 0.0
    %80 = vmatpush1.msra.mxu0 0.0
    %81 = vmatprep.subr.mxu0 0.0
    %82 = vmatpush1.msra.mxu0 0.0
    %83 = vmatprep.subr.mxu0 0.0
    %84 = vmatpush1.msra.mxu0 0.0
    %85 = vmatprep.subr.mxu0 0.0
    %86 = vmatpush1.msra.mxu0 0.0
    %87 = vmatprep.subr.mxu0 0.0
    %88 = vmatpush1.msra.mxu0 0.0
    %89 = vmatprep.subr.mxu0 0.0
    %90 = vmatpush1.msra.mxu0 0.0
    %91 = vmatprep.subr.mxu0 0.0
    %92 = vmatpush1.msra.mxu0 0.0
    %93 = vmatprep.subr.mxu0 0.0
    %94 = vmatpush1.msra.mxu0 0.0
    %95 = vmatprep.subr.mxu0 0.0
    %96 = vmatpush1.msra.mxu0 0.0
    %97 = vmatprep.subr.mxu0 0.0
    %98 = vmatpush1.msra.mxu0 0.0
    %99 = vmatprep.subr.mxu0 0.0
    %100 = vmatpush1.msra.mxu0 0.0
    %101 = vmatprep.subr.mxu0 0.0
    %102 = vmatpush1.msra.mxu0 0.0
    %103 = vmatprep.subr.mxu0 0.0
    %104 = vmatpush1.msra.mxu0 0.0
    %105 = vmatprep.subr.mxu0 0.0
    %106 = vmatpush1.msra.mxu0 0.0
    %107 = vmatprep.subr.mxu0 0.0
    %108 = vmatpush1.msra.mxu0 0.0
    %109 = vmatprep.subr.mxu0 0.0
    %110 = vmatpush1.msra.mxu0 0.0
    %111 = vmatprep.subr.mxu0 0.0
    %112 = vmatpush1.msra.mxu0 0.0
    %113 = vmatprep.subr.mxu0 0.0
    %114 = vmatpush1.msra.mxu0 0.0
    %115 = vmatprep.subr.mxu0 0.0
    %116 = vmatpush1.msra.mxu0 0.0
    %117 = vmatprep.subr.mxu0 0.0
    %118 = vmatpush1.msra.mxu0 0.0
    %119 = vmatprep.subr.mxu0 0.0
    %120 = vmatpush1.msra.mxu0 0.0
    %121 = vmatprep.mubr.f32.mxu0 0.0
    %122 = vmatmul.mubr.f32.gmra.mrb[0].mxu0 %v55
    %v123 = vpop.f32.mrb[0].mxu0
    %v124 = vadd.f32 %v51, %v123
    %v125 = vpop.f32.mrb[0].mxu0
    %126 = vdwg.mxu0
    %127 = vst.msk [vmem:[#allocation7] sm:$0xff] %vm53, %v124
    // Predicated region
    $region22: #{tpu_custom_call.1} parent=1 // pred_check
      _
    $region23: #{tpu_custom_call.1} parent=1 // pred_check_branch
      %129 = sbr.rel (0) target = $region25
    $region24: #{tpu_custom_call.1} parent=1 // pred_region
      %s131 = ssub.s32 128, 128
      %132 = vsyncadd [#allocation4], %s131
      %s134 = sshll.u32 [#allocation7], 4
      %s135 = int_to_ptr.vmem [resolvable:$true] %s134
      %137 = dma.vmem_to_hbm [thread:$0]  %s135, 128, %s3, [#allocation4]
    $region25: #{tpu_custom_call.1} parent=1 // pred_fallthru
      _
    // Predicated region
    $region26: #{tpu_custom_call.1} parent=1 // pred_check
      _
    $region27: #{tpu_custom_call.1} parent=1 // pred_check_branch
      %139 = sbr.rel (0) target = $region29
    $region28: #{tpu_custom_call.1} parent=1 // pred_region
      %140 = dma.done [#allocation4], 128
    $region29: #{tpu_custom_call.1} parent=1 // pred_fallthru
      _
    %141 = vsyncpa [#allocation3], 1
    %142 = vsyncpa [#allocation6], 1
    %143 = vsyncpa [#allocation4], 1

</llo_original>
